<compile_context>
chip_gen: v7x
topology: tpu7x:2x2x1
jax: 0.10.0
libtpu: 0.0.40
codegen_flags: <defaults>
</compile_context>

<pallas_src>
import functools

import jax
import jax.numpy as jnp
from jax.experimental import pallas as pl
from jax.experimental.pallas import tpu as pltpu

IN_FEATURES = 28 * 28   # 784
OUT_FEATURES = 10
OUT_PAD = 128           # lane-dense output width (pad 10 -> 128)


def _round_up(x, m):
    return (x + m - 1) // m * m


def _tb_max():
    # Generation-aware batch-tile cap:
    #  * v6e / v7x: 2048 rows (f32 x tile ~6.4 MB, double-buffered + output
    #    ~15 MB, under the 32 MiB default scoped VMEM).
    #  * everything else (incl. v5e with its 16 MiB scoped default): 1024.
    try:
        kind = jax.devices()[0].device_kind.lower()
    except Exception:
        return 1024
    return 2048 if ("v6" in kind or "v7" in kind) else 1024


def linear_kernel(x_ref, w_ref, b_ref, o_ref):
    # x_ref: (TB, 784) f32 | w_ref: (784, 128) bf16 | b_ref: (1, 128) f32
    # o_ref: (TB, 128) f32
    x = x_ref[...].astype(jnp.bfloat16)          # in-kernel cast: rides idle VPU slots
    acc = jnp.dot(x, w_ref[...], preferred_element_type=jnp.float32)
    o_ref[...] = acc + b_ref[...]


@functools.partial(jax.jit, static_argnames=("tb_max",))
def _linear_forward_impl(x, w, b, *, tb_max):
    batch = x.shape[0]
    # Free view on contiguous NCHW -> (B, 784); keep f32 (single HBM pass).
    x_flat = x.reshape(batch, IN_FEATURES)

    # Pad out-features 10 -> 128 lanes (unmasked stores). Tiny (200 KB), jitted.
    w_p = jnp.zeros((IN_FEATURES, OUT_PAD), jnp.bfloat16)
    w_p = w_p.at[:, :OUT_FEATURES].set(w.astype(jnp.bfloat16))
    b_p = jnp.zeros((1, OUT_PAD), jnp.float32)
    b_p = b_p.at[:, :OUT_FEATURES].set(b.astype(jnp.float32))

    # Batch tile: multiple of 8 (f32 sublanes), capped per-generation, and at
    # least 2 grid steps when the batch permits so ("parallel",) splits the
    # batch axis across v7x's two TensorCores. No jnp.pad — Pallas masks the
    # ragged boundary block.
    tb = 8 if batch <= 8 else min(tb_max, _round_up(pl.cdiv(batch, 2), 8))
    grid = (pl.cdiv(batch, tb),)

    cost = pl.CostEstimate(
        flops=2 * batch * IN_FEATURES * OUT_PAD,
        transcendentals=0,
        bytes_accessed=(batch * IN_FEATURES * 4          # x f32 in
                        + IN_FEATURES * OUT_PAD * 2      # w bf16
                        + OUT_PAD * 4                    # b f32
                        + batch * OUT_PAD * 4),          # out f32
    )

    out = pl.pallas_call(
        linear_kernel,
        out_shape=jax.ShapeDtypeStruct((batch, OUT_PAD), jnp.float32),
        grid=grid,
        in_specs=[
            pl.BlockSpec((tb, IN_FEATURES), lambda i: (i, 0)),       # x: pipelined over batch
            pl.BlockSpec((IN_FEATURES, OUT_PAD), lambda i: (0, 0)),  # w: resident across grid
            pl.BlockSpec((1, OUT_PAD), lambda i: (0, 0)),            # b: resident across grid
        ],
        out_specs=pl.BlockSpec((tb, OUT_PAD), lambda i: (i, 0)),
        compiler_params=pltpu.CompilerParams(
            dimension_semantics=("parallel",),
        ),
        cost_estimate=cost,
    )(x_flat, w_p, b_p)

    return out[:, :OUT_FEATURES]


def linear_forward(x, w, b):
    """x: (B, C, H, W) f32 (C*H*W == 784); w: (784, 10) f32; b: (10,) f32 -> (B, 10) f32."""
    return _linear_forward_impl(x, w, b, tb_max=_tb_max())


def init_params(key):
    # Deterministic init mimicking nn.Linear default (uniform(-1/sqrt(fan_in), +)).
    k_w, k_b = jax.random.split(key)
    bound = 1.0 / jnp.sqrt(jnp.float32(IN_FEATURES))
    # Stored as (in, out) so the kernel computes x @ W without a transpose.
    w = jax.random.uniform(k_w, (IN_FEATURES, OUT_FEATURES), jnp.float32,
                           minval=-bound, maxval=bound)
    b = jax.random.uniform(k_b, (OUT_FEATURES,), jnp.float32,
                           minval=-bound, maxval=bound)
    return w, b


if __name__ == "__main__":
    key = jax.random.PRNGKey(0)
    k_x, k_p = jax.random.split(key)

    # Small MNIST-like input: batch=2, 1 channel, 28x28 spatial (NCHW).
    x = jax.random.normal(k_x, (2, 1, 28, 28), jnp.float32)
    w, b = init_params(k_p)

    out = linear_forward(x, w, b)
    jax.block_until_ready(out)
    assert out.shape == (2, 10)

    # Sanity check vs plain-JAX reference (same bf16 MXU inputs, f32 accumulate).
    ref = jnp.dot(x.reshape(2, -1).astype(jnp.bfloat16),
                  w.astype(jnp.bfloat16),
                  preferred_element_type=jnp.float32) + b
    assert jnp.allclose(out, ref, atol=1e-2, rtol=1e-2)

    # Ragged batch: exercises Pallas boundary-block masking (no jnp.pad copy).
    x2 = jax.random.normal(k_x, (5, 1, 28, 28), jnp.float32)
    out2 = linear_forward(x2, w, b)
    jax.block_until_ready(out2)
    ref2 = jnp.dot(x2.reshape(5, -1).astype(jnp.bfloat16),
                   w.astype(jnp.bfloat16),
                   preferred_element_type=jnp.float32) + b
    assert out2.shape == (5, 10)
    assert jnp.allclose(out2, ref2, atol=1e-2, rtol=1e-2)

    print("KERNEL_OK")
</pallas_src>

<mosaic_0001>
module attributes {stable_mosaic.version = 11 : i64} {
  func.func @linear_kernel(%arg0: i32, %arg1: memref<8x784xf32, #tpu.memory_space<vmem>>, %arg2: memref<784x128xbf16, #tpu.memory_space<vmem>>, %arg3: memref<1x128xf32, #tpu.memory_space<vmem>>, %arg4: memref<8x128xf32, #tpu.memory_space<vmem>>) attributes {dimension_semantics = [#tpu.dimension_semantics<parallel>], iteration_bounds = array<i64: 1>, scalar_prefetch = 0 : i64, scratch_operands = 0 : i64, tpu.core_type = #tpu.core_type<tc>, window_params = [{transform_indices = @transform_0, window_bounds = array<i64: 8, 784>}, {pipeline_mode = #tpu.pipeline_mode<synchronous>, transform_indices = @transform_1, window_bounds = array<i64: 784, 128>}, {pipeline_mode = #tpu.pipeline_mode<synchronous>, transform_indices = @transform_2, window_bounds = array<i64: 1, 128>}, {transform_indices = @transform_3, window_bounds = array<i64: 8, 128>}]} {
    %c0 = arith.constant 0 : index
    %c0_0 = arith.constant 0 : index
    %0 = vector.load %arg1[%c0, %c0_0] : memref<8x784xf32, #tpu.memory_space<vmem>>, vector<8x784xf32>
    %1 = arith.truncf %0 : vector<8x784xf32> to vector<8x784xbf16>
    %c0_1 = arith.constant 0 : index
    %c0_2 = arith.constant 0 : index
    %2 = vector.load %arg2[%c0_1, %c0_2] : memref<784x128xbf16, #tpu.memory_space<vmem>>, vector<784x128xbf16>
    %cst = arith.constant dense<0.000000e+00> : vector<8x128xf32>
    %3 = tpu.matmul %1, %2, %cst {dimension_numbers = #tpu.dot_dimension_numbers<[1], [0], [0], [1], [0, 0, 1, 1], [], []>} : vector<8x784xbf16>, vector<784x128xbf16>, vector<8x128xf32> -> vector<8x128xf32>
    %c0_3 = arith.constant 0 : index
    %c0_4 = arith.constant 0 : index
    %4 = vector.load %arg3[%c0_3, %c0_4] : memref<1x128xf32, #tpu.memory_space<vmem>>, vector<1x128xf32>
    %5 = vector.broadcast %4 : vector<1x128xf32> to vector<8x128xf32>
    %6 = arith.addf %3, %5 : vector<8x128xf32>
    %c0_5 = arith.constant 0 : index
    %c0_6 = arith.constant 0 : index
    %7 = vector.load %arg4[%c0_5, %c0_6] : memref<8x128xf32, #tpu.memory_space<vmem>>, vector<8x128xf32>
    tpu.vector_store %arg4[%c0_5, %c0_6], %6 {strides = array<i32>} : memref<8x128xf32, #tpu.memory_space<vmem>>, vector<8x128xf32>,
    return
  }
  func.func @transform_0(%arg0: i32) -> (i32, i32) {
    %c0_i32 = arith.constant 0 : i32
    %c0_i32_0 = arith.constant 0 : i32
    return %arg0, %c0_i32 : i32, i32
  }
  func.func @transform_1(%arg0: i32) -> (i32, i32) {
    %c0_i32 = arith.constant 0 : i32
    %c0_i32_0 = arith.constant 0 : i32
    %c0_i32_1 = arith.constant 0 : i32
    return %c0_i32, %c0_i32_0 : i32, i32
  }
  func.func @transform_2(%arg0: i32) -> (i32, i32) {
    %c0_i32 = arith.constant 0 : i32
    %c0_i32_0 = arith.constant 0 : i32
    %c0_i32_1 = arith.constant 0 : i32
    return %c0_i32, %c0_i32_0 : i32, i32
  }
  func.func @transform_3(%arg0: i32) -> (i32, i32) {
    %c0_i32 = arith.constant 0 : i32
    %c0_i32_0 = arith.constant 0 : i32
    return %arg0, %c0_i32 : i32, i32
  }
}

</mosaic_0001>

<llo_original>
// kernel: _linear_forward_impl.1
$region0: #{_linear_forward_impl.1}
  #allocation0 [shape = 'u32[]', space=smem, size = 0x4, offset = 0x4, fixed_abs, tag = 'smem constant byte address 0x4 - core index']
  #allocation1 [shape = 'u32[144,128]{1,0:T(1,128)}', space=vmem, size = 0x12000, scoped, tag = 'internal scratch']
  %s0 = inlined_call_operand.vmem [shape: f32[2,784], index: 0, kind: input, shape index: {}]
  %s1 = inlined_call_operand.vmem [shape: bf16[784,128], index: 1, kind: input, shape index: {}]
  %s2 = inlined_call_operand.vmem [shape: f32[1,128], index: 2, kind: input, shape index: {}]
  %s3 = inlined_call_operand.hbm [shape: f32[2,128], index: 3, kind: output, shape index: {}]
  %s4 = sld [smem:[#allocation0]]
  $region22: #{_linear_forward_impl.1} parent=0
    _
  %s6 = ssub.s32 1, %s4
  %s7 = scalar_select 0, %s6, %s4
  $region1: #{_linear_forward_impl.1} parent=0
    #allocation2 [shape = 'u8[4096]{0}', space=vmem, size = 0x1000, scoped, tag = 'output window, operand 0, single buffered']
    #allocation3 [shape = 's32[1]{0}', space=sflag, size = 0x4, scoped, tag = 'scoped memory for _linear_forward_impl.1']
    %8 = vsyncpa [#allocation3], 0
    // Predicated region
    $region2: #{_linear_forward_impl.1} parent=1 // pred_check
      _
    $region3: #{_linear_forward_impl.1} parent=1 // pred_check_branch
      %10 = sbr.rel (0) target = $region5
    $region4: #{_linear_forward_impl.1} parent=1 // pred_region
      _
    $region5: #{_linear_forward_impl.1} parent=1 // pred_fallthru
      _
    // Predicated region
    $region6: #{_linear_forward_impl.1} parent=1 // pred_check
      _
    $region7: #{_linear_forward_impl.1} parent=1 // pred_check_branch
      %12 = sbr.rel (0) target = $region9
    $region8: #{_linear_forward_impl.1} parent=1 // pred_region
      _
    $region9: #{_linear_forward_impl.1} parent=1 // pred_fallthru
      _
    // Predicated region
    $region10: #{_linear_forward_impl.1} parent=1 // pred_check
      _
    $region11: #{_linear_forward_impl.1} parent=1 // pred_check_branch
      %14 = sbr.rel (0) target = $region13
    $region12: #{_linear_forward_impl.1} parent=1 // pred_region
      _
    $region13: #{_linear_forward_impl.1} parent=1 // pred_fallthru
      _
    %v16 = vld [vmem:[%s0] sm:$0xff]
    %v17 = vld [vmem:[%s0 + $0x8] sm:$0x3f]
    %v18 = vld [vmem:[%s0 + $0xe] sm:$0xff]
    %v19 = vld [vmem:[%s0 + $0x16] sm:$0x3f]
    %v20 = vld [vmem:[%s0 + $0x1c] sm:$0xff]
    %v21 = vld [vmem:[%s0 + $0x24] sm:$0x3f]
    %v22 = vld [vmem:[%s0 + $0x2a] sm:$0xff]
    %v23 = vld [vmem:[%s0 + $0x32] sm:$0x3f]
    %v32 = vcombine.low %v16, %v18
    %v33 = vcombine.high %v16, %v18
    %v34 = vcombine.low %v20, %v22
    %v35 = vcombine.high %v20, %v22
    %v37 = vunpack.c.l.s4 1983009808
    %v38 = vunpack.c.0.s8 %v37
    %v39 = vlaneseq
    %v40 = vshrl.u32 %v39, 7
    %v41 = vsub.s32 %v38, %v40
    %v42 = vrot.slane %v32, %v41
    %v44 = vunpack.c.l.s4 1983009808
    %v45 = vunpack.c.0.s8 %v44
    %v46 = vlaneseq
    %v47 = vshrl.u32 %v46, 7
    %v48 = vsub.s32 %v45, %v47
    %v49 = vrot.slane %v33, %v48
    %v51 = vunpack.c.l.s4 1983009808
    %v52 = vunpack.c.0.s8 %v51
    %v53 = vlaneseq
    %v54 = vshrl.u32 %v53, 7
    %v55 = vsub.s32 %v52, %v54
    %v56 = vrot.slane %v34, %v55
    %v58 = vunpack.c.l.s4 1983009808
    %v59 = vunpack.c.0.s8 %v58
    %v60 = vlaneseq
    %v61 = vshrl.u32 %v60, 7
    %v62 = vsub.s32 %v59, %v61
    %v63 = vrot.slane %v35, %v62
    %v64 = vcombine.low %v42, %v56
    %v65 = vcombine.high %v42, %v56
    %v66 = vcombine.low %v49, %v63
    %v67 = vcombine.high %v49, %v63
    %v68 = vcombine.low %v17, %v19
    %v69 = vcombine.high %v17, %v19
    %v70 = vcombine.low %v21, %v23
    %v71 = vcombine.high %v21, %v23
    %v73 = vunpack.c.l.s4 1983009808
    %v74 = vunpack.c.0.s8 %v73
    %v75 = vlaneseq
    %v76 = vshrl.u32 %v75, 7
    %v77 = vsub.s32 %v74, %v76
    %v78 = vrot.slane %v68, %v77
    %v80 = vunpack.c.l.s4 1983009808
    %v81 = vunpack.c.0.s8 %v80
    %v82 = vlaneseq
    %v83 = vshrl.u32 %v82, 7
    %v84 = vsub.s32 %v81, %v83
    %v85 = vrot.slane %v69, %v84
    %v87 = vunpack.c.l.s4 1983009808
    %v88 = vunpack.c.0.s8 %v87
    %v89 = vlaneseq
    %v90 = vshrl.u32 %v89, 7
    %v91 = vsub.s32 %v88, %v90
    %v92 = vrot.slane %v70, %v91
    %v94 = vunpack.c.l.s4 1983009808
    %v95 = vunpack.c.0.s8 %v94
    %v96 = vlaneseq
    %v97 = vshrl.u32 %v96, 7
    %v98 = vsub.s32 %v95, %v97
    %v99 = vrot.slane %v71, %v98
    %v100 = vcombine.low %v78, %v92
    %v101 = vcombine.high %v78, %v92
    %v102 = vcombine.low %v85, %v99
    %v110 = vpack.c.bf16 %v64, %v64
    %v111 = vpack.c.bf16 %v65, %v65
    %v112 = vpack.c.bf16 %v66, %v66
    %v113 = vpack.c.bf16 %v67, %v67
    %v114 = vpack.c.bf16 %v100, %v100
    %v115 = vpack.c.bf16 %v101, %v101
    %v116 = vpack.c.bf16 %v102, %v102
    %v117 = vld [vmem:[%s1] sm:$0xf]
    %v118 = vld [vmem:[%s1 + $0x4] sm:$0xf]
    %v119 = vld [vmem:[%s1 + $0x8] sm:$0xf]
    %v120 = vld [vmem:[%s1 + $0xc] sm:$0xf]
    %v121 = vld [vmem:[%s1 + $0x10] sm:$0xf]
    %v122 = vld [vmem:[%s1 + $0x14] sm:$0xf]
    %v123 = vld [vmem:[%s1 + $0x18] sm:$0xf]
    %v124 = vld [vmem:[%s1 + $0x1c] sm:$0xf]
    %v125 = vld [vmem:[%s1 + $0x20] sm:$0xf]
    %v126 = vld [vmem:[%s1 + $0x24] sm:$0xf]
    %v127 = vld [vmem:[%s1 + $0x28] sm:$0xf]
    %v128 = vld [vmem:[%s1 + $0x2c] sm:$0xf]
    %v129 = vld [vmem:[%s1 + $0x30] sm:$0xf]
    %v130 = vld [vmem:[%s1 + $0x34] sm:$0xf]
    %v131 = vld [vmem:[%s1 + $0x38] sm:$0xf]
    %v132 = vld [vmem:[%s1 + $0x3c] sm:$0xf]
    %v133 = vld [vmem:[%s1 + $0x40] sm:$0xf]
    %v134 = vld [vmem:[%s1 + $0x44] sm:$0xf]
    %v135 = vld [vmem:[%s1 + $0x48] sm:$0xf]
    %v136 = vld [vmem:[%s1 + $0x4c] sm:$0xf]
    %v137 = vld [vmem:[%s1 + $0x50] sm:$0xf]
    %v138 = vld [vmem:[%s1 + $0x54] sm:$0xf]
    %v139 = vld [vmem:[%s1 + $0x58] sm:$0xf]
    %v140 = vld [vmem:[%s1 + $0x5c] sm:$0xf]
    %v141 = vld [vmem:[%s1 + $0x60] sm:$0xf]
    %v142 = vld [vmem:[%s1 + $0x64] sm:$0xf]
    %v143 = vld [vmem:[%s1 + $0x68] sm:$0xf]
    %v144 = vld [vmem:[%s1 + $0x6c] sm:$0xf]
    %v145 = vld [vmem:[%s1 + $0x70] sm:$0xf]
    %v146 = vld [vmem:[%s1 + $0x74] sm:$0xf]
    %v147 = vld [vmem:[%s1 + $0x78] sm:$0xf]
    %v148 = vld [vmem:[%s1 + $0x7c] sm:$0xf]
    %v149 = vld [vmem:[%s1 + $0x80] sm:$0xf]
    %v150 = vld [vmem:[%s1 + $0x84] sm:$0xf]
    %v151 = vld [vmem:[%s1 + $0x88] sm:$0xf]
    %v152 = vld [vmem:[%s1 + $0x8c] sm:$0xf]
    %v153 = vld [vmem:[%s1 + $0x90] sm:$0xf]
    %v154 = vld [vmem:[%s1 + $0x94] sm:$0xf]
    %v155 = vld [vmem:[%s1 + $0x98] sm:$0xf]
    %v156 = vld [vmem:[%s1 + $0x9c] sm:$0xf]
    %v157 = vld [vmem:[%s1 + $0xa0] sm:$0xf]
    %v158 = vld [vmem:[%s1 + $0xa4] sm:$0xf]
    %v159 = vld [vmem:[%s1 + $0xa8] sm:$0xf]
    %v160 = vld [vmem:[%s1 + $0xac] sm:$0xf]
    %v161 = vld [vmem:[%s1 + $0xb0] sm:$0xf]
    %v162 = vld [vmem:[%s1 + $0xb4] sm:$0xf]
    %v163 = vld [vmem:[%s1 + $0xb8] sm:$0xf]
    %v164 = vld [vmem:[%s1 + $0xbc] sm:$0xf]
    %v165 = vld [vmem:[%s1 + $0xc0] sm:$0xf]
    %v166 = vld [vmem:[%s1 + $0xc4] sm:$0xf]
    %v167 = vld [vmem:[%s1 + $0xc8] sm:$0xf]
    %v168 = vld [vmem:[%s1 + $0xcc] sm:$0xf]
    %v169 = vld [vmem:[%s1 + $0xd0] sm:$0xf]
    %v170 = vld [vmem:[%s1 + $0xd4] sm:$0xf]
    %v171 = vld [vmem:[%s1 + $0xd8] sm:$0xf]
    %v172 = vld [vmem:[%s1 + $0xdc] sm:$0xf]
    %v173 = vld [vmem:[%s1 + $0xe0] sm:$0xf]
    %v174 = vld [vmem:[%s1 + $0xe4] sm:$0xf]
    %v175 = vld [vmem:[%s1 + $0xe8] sm:$0xf]
    %v176 = vld [vmem:[%s1 + $0xec] sm:$0xf]
    %v177 = vld [vmem:[%s1 + $0xf0] sm:$0xf]
    %v178 = vld [vmem:[%s1 + $0xf4] sm:$0xf]
    %v179 = vld [vmem:[%s1 + $0xf8] sm:$0xf]
    %v180 = vld [vmem:[%s1 + $0xfc] sm:$0xf]
    %v181 = vld [vmem:[%s1 + $0x100] sm:$0xf]
    %v182 = vld [vmem:[%s1 + $0x104] sm:$0xf]
    %v183 = vld [vmem:[%s1 + $0x108] sm:$0xf]
    %v184 = vld [vmem:[%s1 + $0x10c] sm:$0xf]
    %v185 = vld [vmem:[%s1 + $0x110] sm:$0xf]
    %v186 = vld [vmem:[%s1 + $0x114] sm:$0xf]
    %v187 = vld [vmem:[%s1 + $0x118] sm:$0xf]
    %v188 = vld [vmem:[%s1 + $0x11c] sm:$0xf]
    %v189 = vld [vmem:[%s1 + $0x120] sm:$0xf]
    %v190 = vld [vmem:[%s1 + $0x124] sm:$0xf]
    %v191 = vld [vmem:[%s1 + $0x128] sm:$0xf]
    %v192 = vld [vmem:[%s1 + $0x12c] sm:$0xf]
    %v193 = vld [vmem:[%s1 + $0x130] sm:$0xf]
    %v194 = vld [vmem:[%s1 + $0x134] sm:$0xf]
    %v195 = vld [vmem:[%s1 + $0x138] sm:$0xf]
    %v196 = vld [vmem:[%s1 + $0x13c] sm:$0xf]
    %v197 = vld [vmem:[%s1 + $0x140] sm:$0xf]
    %v198 = vld [vmem:[%s1 + $0x144] sm:$0xf]
    %v199 = vld [vmem:[%s1 + $0x148] sm:$0xf]
    %v200 = vld [vmem:[%s1 + $0x14c] sm:$0xf]
    %v201 = vld [vmem:[%s1 + $0x150] sm:$0xf]
    %v202 = vld [vmem:[%s1 + $0x154] sm:$0xf]
    %v203 = vld [vmem:[%s1 + $0x158] sm:$0xf]
    %v204 = vld [vmem:[%s1 + $0x15c] sm:$0xf]
    %v205 = vld [vmem:[%s1 + $0x160] sm:$0xf]
    %v206 = vld [vmem:[%s1 + $0x164] sm:$0xf]
    %v207 = vld [vmem:[%s1 + $0x168] sm:$0xf]
    %v208 = vld [vmem:[%s1 + $0x16c] sm:$0xf]
    %v209 = vld [vmem:[%s1 + $0x170] sm:$0xf]
    %v210 = vld [vmem:[%s1 + $0x174] sm:$0xf]
    %v211 = vld [vmem:[%s1 + $0x178] sm:$0xf]
    %v212 = vld [vmem:[%s1 + $0x17c] sm:$0xf]
    %v213 = vld [vmem:[%s1 + $0x180] sm:$0xf]
    %v214 = vld [vmem:[%s1 + $0x184] sm:$0xf]
    %v215 = vld [vmem:[%s2] sm:$0x1]
    %v217 = vlaneseq
    %v218 = vshrl.u32 %v217, 7
    %v219 = vsub.s32 0, %v218
    %v220 = vrot.slane %v215, %v219
    %v320 = vunpack.c.l.b16 %v117
    %v321 = vunpack.c.l.b16 %v118
    %v322 = vunpack.c.l.b16 %v119
    %v323 = vunpack.c.l.b16 %v120
    %v324 = vunpack.c.l.b16 %v121
    %v325 = vunpack.c.l.b16 %v122
    %v326 = vunpack.c.l.b16 %v123
    %v327 = vunpack.c.l.b16 %v124
    %v328 = vunpack.c.l.b16 %v125
    %v329 = vunpack.c.l.b16 %v126
    %v330 = vunpack.c.l.b16 %v127
    %v331 = vunpack.c.l.b16 %v128
    %v332 = vunpack.c.l.b16 %v129
    %v333 = vunpack.c.l.b16 %v130
    %v334 = vunpack.c.l.b16 %v131
    %v335 = vunpack.c.l.b16 %v132
    %v336 = vunpack.c.l.b16 %v133
    %v337 = vunpack.c.l.b16 %v134
    %v338 = vunpack.c.l.b16 %v135
    %v339 = vunpack.c.l.b16 %v136
    %v340 = vunpack.c.l.b16 %v137
    %v341 = vunpack.c.l.b16 %v138
    %v342 = vunpack.c.l.b16 %v139
    %v343 = vunpack.c.l.b16 %v140
    %v344 = vunpack.c.l.b16 %v141
    %v345 = vunpack.c.l.b16 %v142
    %v346 = vunpack.c.l.b16 %v143
    %v347 = vunpack.c.l.b16 %v144
    %v348 = vunpack.c.l.b16 %v145
    %v349 = vunpack.c.l.b16 %v146
    %v350 = vunpack.c.l.b16 %v147
    %v351 = vunpack.c.l.b16 %v148
    %v352 = vunpack.c.l.b16 %v149
    %v353 = vunpack.c.l.b16 %v150
    %v354 = vunpack.c.l.b16 %v151
    %v355 = vunpack.c.l.b16 %v152
    %v356 = vunpack.c.l.b16 %v153
    %v357 = vunpack.c.l.b16 %v154
    %v358 = vunpack.c.l.b16 %v155
    %v359 = vunpack.c.l.b16 %v156
    %v360 = vunpack.c.l.b16 %v157
    %v361 = vunpack.c.l.b16 %v158
    %v362 = vunpack.c.l.b16 %v159
    %v363 = vunpack.c.l.b16 %v160
    %v364 = vunpack.c.l.b16 %v161
    %v365 = vunpack.c.l.b16 %v162
    %v366 = vunpack.c.l.b16 %v163
    %v367 = vunpack.c.l.b16 %v164
    %v368 = vunpack.c.l.b16 %v165
    %v369 = vunpack.c.l.b16 %v166
    %v370 = vunpack.c.l.b16 %v167
    %v371 = vunpack.c.l.b16 %v168
    %v372 = vunpack.c.l.b16 %v169
    %v373 = vunpack.c.l.b16 %v170
    %v374 = vunpack.c.l.b16 %v171
    %v375 = vunpack.c.l.b16 %v172
    %v376 = vunpack.c.l.b16 %v173
    %v377 = vunpack.c.l.b16 %v174
    %v378 = vunpack.c.l.b16 %v175
    %v379 = vunpack.c.l.b16 %v176
    %v380 = vunpack.c.l.b16 %v177
    %v381 = vunpack.c.l.b16 %v178
    %v382 = vunpack.c.l.b16 %v179
    %v383 = vunpack.c.l.b16 %v180
    %v384 = vunpack.c.l.b16 %v181
    %v385 = vunpack.c.l.b16 %v182
    %v386 = vunpack.c.l.b16 %v183
    %v387 = vunpack.c.l.b16 %v184
    %v388 = vunpack.c.l.b16 %v185
    %v389 = vunpack.c.l.b16 %v186
    %v390 = vunpack.c.l.b16 %v187
    %v391 = vunpack.c.l.b16 %v188
    %v392 = vunpack.c.l.b16 %v189
    %v393 = vunpack.c.l.b16 %v190
    %v394 = vunpack.c.l.b16 %v191
    %v395 = vunpack.c.l.b16 %v192
    %v396 = vunpack.c.l.b16 %v193
    %v397 = vunpack.c.l.b16 %v194
    %v398 = vunpack.c.l.b16 %v195
    %v399 = vunpack.c.l.b16 %v196
    %v400 = vunpack.c.l.b16 %v197
    %v401 = vunpack.c.l.b16 %v198
    %v402 = vunpack.c.l.b16 %v199
    %v403 = vunpack.c.l.b16 %v200
    %v404 = vunpack.c.l.b16 %v201
    %v405 = vunpack.c.l.b16 %v202
    %v406 = vunpack.c.l.b16 %v203
    %v407 = vunpack.c.l.b16 %v204
    %v408 = vunpack.c.l.b16 %v205
    %v409 = vunpack.c.l.b16 %v206
    %v410 = vunpack.c.l.b16 %v207
    %v411 = vunpack.c.l.b16 %v208
    %v412 = vunpack.c.l.b16 %v209
    %v413 = vunpack.c.l.b16 %v210
    %v414 = vunpack.c.l.b16 %v211
    %v415 = vunpack.c.l.b16 %v212
    %v416 = vunpack.c.l.b16 %v213
    %v417 = vunpack.c.l.b16 %v214
    %v418 = vpack.c.b16 %v321, %v320
    %v419 = vpack.c.b16 %v323, %v322
    %v420 = vpack.c.b16 %v325, %v324
    %v421 = vpack.c.b16 %v327, %v326
    %v422 = vpack.c.b16 %v329, %v328
    %v423 = vpack.c.b16 %v331, %v330
    %v424 = vpack.c.b16 %v333, %v332
    %v425 = vpack.c.b16 %v335, %v334
    %v426 = vpack.c.b16 %v337, %v336
    %v427 = vpack.c.b16 %v339, %v338
    %v428 = vpack.c.b16 %v341, %v340
    %v429 = vpack.c.b16 %v343, %v342
    %v430 = vpack.c.b16 %v345, %v344
    %v431 = vpack.c.b16 %v347, %v346
    %v432 = vpack.c.b16 %v349, %v348
    %v433 = vpack.c.b16 %v351, %v350
    %v434 = vpack.c.b16 %v353, %v352
    %v435 = vpack.c.b16 %v355, %v354
    %v436 = vpack.c.b16 %v357, %v356
    %v437 = vpack.c.b16 %v359, %v358
    %v438 = vpack.c.b16 %v361, %v360
    %v439 = vpack.c.b16 %v363, %v362
    %v440 = vpack.c.b16 %v365, %v364
    %v441 = vpack.c.b16 %v367, %v366
    %v442 = vpack.c.b16 %v369, %v368
    %v443 = vpack.c.b16 %v371, %v370
    %v444 = vpack.c.b16 %v373, %v372
    %v445 = vpack.c.b16 %v375, %v374
    %v446 = vpack.c.b16 %v377, %v376
    %v447 = vpack.c.b16 %v379, %v378
    %v448 = vpack.c.b16 %v381, %v380
    %v449 = vpack.c.b16 %v383, %v382
    %v450 = vpack.c.b16 %v385, %v384
    %v451 = vpack.c.b16 %v387, %v386
    %v452 = vpack.c.b16 %v389, %v388
    %v453 = vpack.c.b16 %v391, %v390
    %v454 = vpack.c.b16 %v393, %v392
    %v455 = vpack.c.b16 %v395, %v394
    %v456 = vpack.c.b16 %v397, %v396
    %v457 = vpack.c.b16 %v399, %v398
    %v458 = vpack.c.b16 %v401, %v400
    %v459 = vpack.c.b16 %v403, %v402
    %v460 = vpack.c.b16 %v405, %v404
    %v461 = vpack.c.b16 %v407, %v406
    %v462 = vpack.c.b16 %v409, %v408
    %v463 = vpack.c.b16 %v411, %v410
    %v464 = vpack.c.b16 %v413, %v412
    %v465 = vpack.c.b16 %v415, %v414
    %v466 = vpack.c.b16 %v417, %v416
    %vm516 = vcmask 130048
    %v518 = vsel %vm516, %v116, 0
    %520 = vmatprep.subr.bf16.mxu0 0
    %521 = vmatpush1.bf16.msra.mxu0 %v418
    %522 = vmatprep.subr.bf16.mxu0 0
    %523 = vmatpush1.bf16.msra.mxu0 %v419
    %524 = vmatprep.subr.bf16.mxu0 0
    %525 = vmatpush1.bf16.msra.mxu0 %v420
    %526 = vmatprep.subr.bf16.mxu0 0
    %527 = vmatpush1.bf16.msra.mxu0 %v421
    %528 = vmatprep.subr.bf16.mxu0 0
    %529 = vmatpush1.bf16.msra.mxu0 %v422
    %530 = vmatprep.subr.bf16.mxu0 0
    %531 = vmatpush1.bf16.msra.mxu0 %v423
    %532 = vmatprep.subr.bf16.mxu0 0
    %533 = vmatpush1.bf16.msra.mxu0 %v424
    %534 = vmatprep.subr.bf16.mxu0 0
    %535 = vmatpush1.bf16.msra.mxu0 %v425
    %536 = vmatprep.subr.bf16.mxu0 0
    %537 = vmatpush1.bf16.msra.mxu0 %v426
    %538 = vmatprep.subr.bf16.mxu0 0
    %539 = vmatpush1.bf16.msra.mxu0 %v427
    %540 = vmatprep.subr.bf16.mxu0 0
    %541 = vmatpush1.bf16.msra.mxu0 %v428
    %542 = vmatprep.subr.bf16.mxu0 0
    %543 = vmatpush1.bf16.msra.mxu0 %v429
    %544 = vmatprep.subr.bf16.mxu0 0
    %545 = vmatpush1.bf16.msra.mxu0 %v430
    %546 = vmatprep.subr.bf16.mxu0 0
    %547 = vmatpush1.bf16.msra.mxu0 %v431
    %548 = vmatprep.subr.bf16.mxu0 0
    %549 = vmatpush1.bf16.msra.mxu0 %v432
    %550 = vmatprep.subr.bf16.mxu0 0
    %551 = vmatpush1.bf16.msra.mxu0 %v433
    %552 = vmatprep.mubr.bf16.mxu0 %v111
    %553 = vmatmul.mubr.bf16.gmra.mrb[0].mxu0 %v110
    %v554 = vpop.f32.mrb[0].mxu0
    %v555 = vadd.f32 %v220, %v554
    %v556 = vpop.f32.mrb[0].mxu0
    %v557 = vpop.f32.mrb[0].mxu0
    %v558 = vpop.f32.mrb[0].mxu0
    %559 = vdwg.mxu0
    %560 = vmatprep.subr.bf16.mxu0 0
    %561 = vmatpush1.bf16.msra.mxu0 %v434
    %562 = vmatprep.subr.bf16.mxu0 0
    %563 = vmatpush1.bf16.msra.mxu0 %v435
    %564 = vmatprep.subr.bf16.mxu0 0
    %565 = vmatpush1.bf16.msra.mxu0 %v436
    %566 = vmatprep.subr.bf16.mxu0 0
    %567 = vmatpush1.bf16.msra.mxu0 %v437
    %568 = vmatprep.subr.bf16.mxu0 0
    %569 = vmatpush1.bf16.msra.mxu0 %v438
    %570 = vmatprep.subr.bf16.mxu0 0
    %571 = vmatpush1.bf16.msra.mxu0 %v439
    %572 = vmatprep.subr.bf16.mxu0 0
    %573 = vmatpush1.bf16.msra.mxu0 %v440
    %574 = vmatprep.subr.bf16.mxu0 0
    %575 = vmatpush1.bf16.msra.mxu0 %v441
    %576 = vmatprep.subr.bf16.mxu0 0
    %577 = vmatpush1.bf16.msra.mxu0 %v442
    %578 = vmatprep.subr.bf16.mxu0 0
    %579 = vmatpush1.bf16.msra.mxu0 %v443
    %580 = vmatprep.subr.bf16.mxu0 0
    %581 = vmatpush1.bf16.msra.mxu0 %v444
    %582 = vmatprep.subr.bf16.mxu0 0
    %583 = vmatpush1.bf16.msra.mxu0 %v445
    %584 = vmatprep.subr.bf16.mxu0 0
    %585 = vmatpush1.bf16.msra.mxu0 %v446
    %586 = vmatprep.subr.bf16.mxu0 0
    %587 = vmatpush1.bf16.msra.mxu0 %v447
    %588 = vmatprep.subr.bf16.mxu0 0
    %589 = vmatpush1.bf16.msra.mxu0 %v448
    %590 = vmatprep.subr.bf16.mxu0 0
    %591 = vmatpush1.bf16.msra.mxu0 %v449
    %592 = vmatprep.mubr.bf16.mxu0 %v113
    %593 = vmatmul.mubr.bf16.gmra.mrb[0].mxu0 %v112
    %v594 = vpop.f32.mrb[0].mxu0
    %v595 = vadd.f32 %v555, %v594
    %v596 = vpop.f32.mrb[0].mxu0
    %v597 = vpop.f32.mrb[0].mxu0
    %v598 = vpop.f32.mrb[0].mxu0
    %599 = vdwg.mxu0
    %600 = vmatprep.subr.bf16.mxu0 0
    %601 = vmatpush1.bf16.msra.mxu0 %v450
    %602 = vmatprep.subr.bf16.mxu0 0
    %603 = vmatpush1.bf16.msra.mxu0 %v451
    %604 = vmatprep.subr.bf16.mxu0 0
    %605 = vmatpush1.bf16.msra.mxu0 %v452
    %606 = vmatprep.subr.bf16.mxu0 0
    %607 = vmatpush1.bf16.msra.mxu0 %v453
    %608 = vmatprep.subr.bf16.mxu0 0
    %609 = vmatpush1.bf16.msra.mxu0 %v454
    %610 = vmatprep.subr.bf16.mxu0 0
    %611 = vmatpush1.bf16.msra.mxu0 %v455
    %612 = vmatprep.subr.bf16.mxu0 0
    %613 = vmatpush1.bf16.msra.mxu0 %v456
    %614 = vmatprep.subr.bf16.mxu0 0
    %615 = vmatpush1.bf16.msra.mxu0 %v457
    %616 = vmatprep.subr.bf16.mxu0 0
    %617 = vmatpush1.bf16.msra.mxu0 %v458
    %618 = vmatprep.subr.bf16.mxu0 0
    %619 = vmatpush1.bf16.msra.mxu0 %v459
    %620 = vmatprep.subr.bf16.mxu0 0
    %621 = vmatpush1.bf16.msra.mxu0 %v460
    %622 = vmatprep.subr.bf16.mxu0 0
    %623 = vmatpush1.bf16.msra.mxu0 %v461
    %624 = vmatprep.subr.bf16.mxu0 0
    %625 = vmatpush1.bf16.msra.mxu0 %v462
    %626 = vmatprep.subr.bf16.mxu0 0
    %627 = vmatpush1.bf16.msra.mxu0 %v463
    %628 = vmatprep.subr.bf16.mxu0 0
    %629 = vmatpush1.bf16.msra.mxu0 %v464
    %630 = vmatprep.subr.bf16.mxu0 0
    %631 = vmatpush1.bf16.msra.mxu0 %v465
    %632 = vmatprep.mubr.bf16.mxu0 %v115
    %633 = vmatmul.mubr.bf16.gmra.mrb[0].mxu0 %v114
    %v634 = vpop.f32.mrb[0].mxu0
    %v635 = vadd.f32 %v595, %v634
    %v636 = vpop.f32.mrb[0].mxu0
    %v637 = vpop.f32.mrb[0].mxu0
    %v638 = vpop.f32.mrb[0].mxu0
    %639 = vdwg.mxu0
    %640 = vmatprep.subr.bf16.mxu0 0
    %641 = vmatpush1.bf16.msra.mxu0 %v466
    %642 = vmatprep.subr.bf16.mxu0 0
    %643 = vmatpush1.bf16.msra.mxu0 0
    %644 = vmatprep.subr.bf16.mxu0 0
    %645 = vmatpush1.bf16.msra.mxu0 0
    %646 = vmatprep.subr.bf16.mxu0 0
    %647 = vmatpush1.bf16.msra.mxu0 0
    %648 = vmatprep.subr.bf16.mxu0 0
    %649 = vmatpush1.bf16.msra.mxu0 0
    %650 = vmatprep.subr.bf16.mxu0 0
    %651 = vmatpush1.bf16.msra.mxu0 0
    %652 = vmatprep.subr.bf16.mxu0 0
    %653 = vmatpush1.bf16.msra.mxu0 0
    %654 = vmatprep.subr.bf16.mxu0 0
    %655 = vmatpush1.bf16.msra.mxu0 0
    %656 = vmatprep.subr.bf16.mxu0 0
    %657 = vmatpush1.bf16.msra.mxu0 0
    %658 = vmatprep.subr.bf16.mxu0 0
    %659 = vmatpush1.bf16.msra.mxu0 0
    %660 = vmatprep.subr.bf16.mxu0 0
    %661 = vmatpush1.bf16.msra.mxu0 0
    %662 = vmatprep.subr.bf16.mxu0 0
    %663 = vmatpush1.bf16.msra.mxu0 0
    %664 = vmatprep.subr.bf16.mxu0 0
    %665 = vmatpush1.bf16.msra.mxu0 0
    %666 = vmatprep.subr.bf16.mxu0 0
    %667 = vmatpush1.bf16.msra.mxu0 0
    %668 = vmatprep.subr.bf16.mxu0 0
    %669 = vmatpush1.bf16.msra.mxu0 0
    %670 = vmatprep.subr.bf16.mxu0 0
    %671 = vmatpush1.bf16.msra.mxu0 0
    %672 = vmatprep.mubr.bf16.mxu0 0
    %673 = vmatmul.mubr.bf16.gmra.mrb[0].mxu0 %v518
    %v674 = vpop.f32.mrb[0].mxu0
    %v675 = vadd.f32 %v635, %v674
    %v676 = vpop.f32.mrb[0].mxu0
    %v677 = vpop.f32.mrb[0].mxu0
    %v678 = vpop.f32.mrb[0].mxu0
    %679 = vdwg.mxu0
    %680 = vst [vmem:[#allocation2] sm:$0xff] %v675
    // Predicated region
    $region14: #{_linear_forward_impl.1} parent=1 // pred_check
      _
    $region15: #{_linear_forward_impl.1} parent=1 // pred_check_branch
      %682 = sbr.rel (0) target = $region17
    $region16: #{_linear_forward_impl.1} parent=1 // pred_region
      %s684 = ssub.s32 128, 32
      %685 = vsyncadd [#allocation3], %s684
      %s686 = sshll.u32 [#allocation2], 4
      %s687 = int_to_ptr.vmem [resolvable:$true] %s686
      %692 = dma.vmem_to_hbm [thread:$0]  %s687, 32, %s3, [#allocation3], 32, 32, 2
    $region17: #{_linear_forward_impl.1} parent=1 // pred_fallthru
      _
    // Predicated region
    $region18: #{_linear_forward_impl.1} parent=1 // pred_check
      _
    $region19: #{_linear_forward_impl.1} parent=1 // pred_check_branch
      %694 = sbr.rel (0) target = $region21
    $region20: #{_linear_forward_impl.1} parent=1 // pred_region
      %695 = dma.done [#allocation3], 128
    $region21: #{_linear_forward_impl.1} parent=1 // pred_fallthru
      _
    %696 = vsyncpa [#allocation3], 1

</llo_original>
